<compile_context>
chip_gen: v7x
topology: tpu7x:2x2x1
jax: 0.10.0
libtpu: 0.0.40
codegen_flags: <defaults>
</compile_context>

<pallas_src>
import functools

import jax
import jax.numpy as jnp
from jax.experimental import pallas as pl
from jax.experimental.pallas import tpu as pltpu


def _round_up(n, m):
    return ((n + m - 1) // m) * m


def _tile(dim, cap, align):
    """Tile size: the full (padded) dim when small, otherwise `cap`."""
    return min(cap, _round_up(dim, align))


def drop_linear_kernel(x_ref, w_ref, b_ref, o_ref, *, inv_keep):
    """One (i, j, k) grid step of y = dropout(x) @ W.T + b.

    x_ref: (tm, tk) bf16, dropout mask already fused (dropped columns are 0).
    w_ref: (tk, tn) bf16, pre-transposed weight (NOT pre-scaled).
    b_ref: (1, tn)  f32 bias.
    o_ref: (tm, tn) f32 output tile, used directly as the accumulator; the
           output BlockSpec returns the same (i, j) block for every k, so it
           stays VMEM-resident across the reduction axis.
    """
    k = pl.program_id(2)

    @pl.when(k == 0)
    def _init():
        o_ref[...] = jnp.zeros_like(o_ref)

    # bf16 x bf16 -> f32 on the MXU; weight tile is already (tk, tn).
    o_ref[...] += jnp.dot(x_ref[...], w_ref[...],
                          preferred_element_type=jnp.float32)

    @pl.when(k == pl.num_programs(2) - 1)
    def _finalize():
        acc = o_ref[...]
        if inv_keep != 1.0:  # static Python branch: no-op in eval / p==0
            acc = acc * jnp.float32(inv_keep)  # survivor scale, VPU, hidden under MXU
        o_ref[...] = acc + b_ref[...]


def prepare_drop_linear_params(weight, bias, *, tn_cap=512, tk_cap=2048):
    """One-time per-parameter prep (hoisted out of the per-call path).

    weight: (out_features, in_features)  -- torch.nn.Linear layout
    bias:   (out_features,)
    Returns a dict with the padded transposed bf16 weight slab, padded f32
    bias, and the (tn, tk) tiling derived from the layer shape.
    """
    out_f, in_f = weight.shape
    # 256-aligned tiles fill the 2x256x256 MXU on v6e/v7x; 128 suffices on v5e
    # and for small dims (where the block is the full padded dim anyway).
    n_align = 256 if out_f >= 256 else 128
    k_align = 256 if in_f >= 256 else 128
    tn = _tile(out_f, tn_cap, n_align)
    tk = _tile(in_f, tk_cap, k_align)
    pad_n = _round_up(out_f, tn)
    pad_k = _round_up(in_f, tk)

    w_t = weight.T.astype(jnp.bfloat16)          # (in_f, out_f), no 1/(1-p) here
    if (pad_k, pad_n) != (in_f, out_f):
        w_t = jnp.pad(w_t, ((0, pad_k - in_f), (0, pad_n - out_f)))

    b_p = bias.astype(jnp.float32)
    if pad_n != out_f:
        b_p = jnp.pad(b_p, (0, pad_n - out_f))
    b_p = b_p.reshape(1, pad_n)

    return dict(w_p=w_t, b_p=b_p, in_f=in_f, out_f=out_f,
                tn=tn, tk=tk, pad_n=pad_n, pad_k=pad_k)


def drop_linear(x, params, *, dropout_rate, key=None, training=True, tm_cap=512):
    """Forward of DropLinear: linear(dropout(x)).

    x:      (B, in_features) float32
    params: output of prepare_drop_linear_params (cached across calls).
    """
    B, in_f = x.shape
    assert in_f == params["in_f"], "x feature dim does not match prepared weight"
    out_f = params["out_f"]
    tn, tk = params["tn"], params["tk"]
    pad_n, pad_k = params["pad_n"], params["pad_k"]

    # ---- dropout: mask fused into x in f32 (one fused pass with the bf16
    # cast); 1/(1-p) survivor scale deferred to the kernel finalize. ----------
    apply_dropout = training and dropout_rate > 0.0
    if apply_dropout and dropout_rate >= 1.0:
        x_in = jnp.zeros_like(x)        # Dropout(p=1) zeroes everything
        inv_keep = 1.0
    elif apply_dropout:
        keep = jax.random.bernoulli(key, 1.0 - dropout_rate, (B, in_f))
        x_in = jnp.where(keep, x, 0.0)  # f32 select, fuses with the cast below
        inv_keep = 1.0 / (1.0 - dropout_rate)
    else:
        x_in = x                        # eval / p==0: no mask array at all
        inv_keep = 1.0
    x_bf = x_in.astype(jnp.bfloat16)

    # ---- batch tiling: 16-aligned (bf16 packs 16 sublanes per vreg) ----------
    tm = _tile(B, tm_cap, 16)
    pad_b = _round_up(B, tm)
    if (pad_b, pad_k) != (B, in_f):
        x_bf = jnp.pad(x_bf, ((0, pad_b - B), (0, pad_k - in_f)))

    grid = (pad_b // tm, pad_n // tn, pad_k // tk)
    # VMEM footprint @ caps (tm=tn=512, tk=2048, double-buffered):
    #   x 2*2MiB + W 2*2MiB + out 2*1MiB + bias ~0  ->  ~10 MiB, under the
    #   32 MiB default scoped VMEM on v5e/v6e/v7x; no vmem_limit override needed.
    # TODO(synk): on v7x, if B and out_f are both <= one tile, halve tn so the
    # "parallel" axes expose >=2 blocks for the second TensorCore.

    kernel = functools.partial(drop_linear_kernel, inv_keep=float(inv_keep))

    out_padded = pl.pallas_call(
        kernel,
        out_shape=jax.ShapeDtypeStruct((pad_b, pad_n), jnp.float32),
        grid=grid,
        in_specs=[
            pl.BlockSpec((tm, tk), lambda i, j, k: (i, k)),   # x (mask pre-fused)
            pl.BlockSpec((tk, tn), lambda i, j, k: (k, j)),   # W.T (unscaled)
            pl.BlockSpec((1, tn), lambda i, j, k: (0, j)),    # bias
        ],
        out_specs=pl.BlockSpec((tm, tn), lambda i, j, k: (i, j)),
        compiler_params=pltpu.CompilerParams(
            dimension_semantics=("parallel", "parallel", "arbitrary")),
    )(x_bf, params["w_p"], params["b_p"])

    out = out_padded
    if (pad_b, pad_n) != (B, out_f):
        out = out[:B, :out_f]
    return out.astype(x.dtype)


if __name__ == "__main__":
    # Small shapes consistent with the module: batch=8, in_features=32, out_features=16
    B, IN_F, OUT_F = 8, 32, 16
    DROPOUT_RATE = 0.5

    key = jax.random.PRNGKey(0)
    kx, kw, kb, kdrop = jax.random.split(key, 4)

    x = jax.random.normal(kx, (B, IN_F), dtype=jnp.float32)

    # Parameter init mirroring the module's __init__:
    #   xavier_normal_ for weight: std = sqrt(2 / (fan_in + fan_out))
    xavier_std = (2.0 / (IN_F + OUT_F)) ** 0.5
    weight = xavier_std * jax.random.normal(kw, (OUT_F, IN_F), dtype=jnp.float32)
    #   nn.Linear default bias init: U(-1/sqrt(fan_in), 1/sqrt(fan_in))
    bound = 1.0 / (IN_F ** 0.5)
    bias = jax.random.uniform(kb, (OUT_F,), minval=-bound, maxval=bound,
                              dtype=jnp.float32)

    # One-time parameter prep (transpose / cast / pad of W hoisted out of the call).
    params = prepare_drop_linear_params(weight, bias)

    out = drop_linear(x, params, dropout_rate=DROPOUT_RATE, key=kdrop,
                      training=True)
    jax.block_until_ready(out)
    assert out.shape == (B, OUT_F) and out.dtype == jnp.float32

    # Pure-JAX reference with the same dropout mask (bf16 matmul tolerance).
    keep_ref = jax.random.bernoulli(kdrop, 1.0 - DROPOUT_RATE, (B, IN_F))
    x_drop_ref = jnp.where(keep_ref, x / (1.0 - DROPOUT_RATE), 0.0)
    ref = x_drop_ref @ weight.T + bias
    assert jnp.allclose(out, ref, atol=5e-2, rtol=5e-2), "mismatch vs reference"

    # Eval path (no dropout, no mask array) sanity check.
    out_eval = drop_linear(x, params, dropout_rate=DROPOUT_RATE, training=False)
    jax.block_until_ready(out_eval)
    assert jnp.allclose(out_eval, x @ weight.T + bias, atol=5e-2, rtol=5e-2)

    print("KERNEL_OK")
</pallas_src>

<mosaic_0001>
module attributes {stable_mosaic.version = 11 : i64} {
  func.func @drop_linear_kernel(%arg0: i32, %arg1: i32, %arg2: i32, %arg3: memref<16x128xbf16, #tpu.memory_space<vmem>>, %arg4: memref<128x128xbf16, #tpu.memory_space<vmem>>, %arg5: memref<1x128xf32, #tpu.memory_space<vmem>>, %arg6: memref<16x128xf32, #tpu.memory_space<vmem>>) attributes {dimension_semantics = [#tpu.dimension_semantics<parallel>, #tpu.dimension_semantics<parallel>, #tpu.dimension_semantics<arbitrary>], iteration_bounds = array<i64: 1, 1, 1>, scalar_prefetch = 0 : i64, scratch_operands = 0 : i64, tpu.core_type = #tpu.core_type<tc>, window_params = [{transform_indices = @transform_0, window_bounds = array<i64: 16, 128>}, {transform_indices = @transform_1, window_bounds = array<i64: 128, 128>}, {transform_indices = @transform_2, window_bounds = array<i64: 1, 128>}, {transform_indices = @transform_3, window_bounds = array<i64: 16, 128>}]} {
    %c0_i32 = arith.constant 0 : i32
    %0 = arith.cmpi eq, %arg2, %c0_i32 : i32
    %1 = arith.extui %0 : i1 to i32
    %c0_i32_0 = arith.constant 0 : i32
    %2 = arith.cmpi ne, %1, %c0_i32_0 : i32
    scf.if %2 {
      %cst_10 = arith.constant 0.000000e+00 : f32
      %12 = vector.broadcast %cst_10 : f32 to vector<16x128xf32>
      %c0_11 = arith.constant 0 : index
      %c0_12 = arith.constant 0 : index
      %13 = vector.load %arg6[%c0_11, %c0_12] : memref<16x128xf32, #tpu.memory_space<vmem>>, vector<16x128xf32>
      tpu.vector_store %arg6[%c0_11, %c0_12], %12 {strides = array<i32>} : memref<16x128xf32, #tpu.memory_space<vmem>>, vector<16x128xf32>,
    } else {
    }
    %c0 = arith.constant 0 : index
    %c0_1 = arith.constant 0 : index
    %3 = vector.load %arg6[%c0, %c0_1] : memref<16x128xf32, #tpu.memory_space<vmem>>, vector<16x128xf32>
    %c0_2 = arith.constant 0 : index
    %c0_3 = arith.constant 0 : index
    %4 = vector.load %arg3[%c0_2, %c0_3] : memref<16x128xbf16, #tpu.memory_space<vmem>>, vector<16x128xbf16>
    %c0_4 = arith.constant 0 : index
    %c0_5 = arith.constant 0 : index
    %5 = vector.load %arg4[%c0_4, %c0_5] : memref<128x128xbf16, #tpu.memory_space<vmem>>, vector<128x128xbf16>
    %cst = arith.constant dense<0.000000e+00> : vector<16x128xf32>
    %6 = tpu.matmul %4, %5, %cst {dimension_numbers = #tpu.dot_dimension_numbers<[1], [0], [0], [1], [0, 0, 1, 1], [], []>} : vector<16x128xbf16>, vector<128x128xbf16>, vector<16x128xf32> -> vector<16x128xf32>
    %7 = arith.addf %3, %6 : vector<16x128xf32>
    %c0_6 = arith.constant 0 : index
    %c0_7 = arith.constant 0 : index
    %8 = vector.load %arg6[%c0_6, %c0_7] : memref<16x128xf32, #tpu.memory_space<vmem>>, vector<16x128xf32>
    tpu.vector_store %arg6[%c0_6, %c0_7], %7 {strides = array<i32>} : memref<16x128xf32, #tpu.memory_space<vmem>>, vector<16x128xf32>,
    %c0_i32_8 = arith.constant 0 : i32
    %9 = arith.cmpi eq, %arg2, %c0_i32_8 : i32
    %10 = arith.extui %9 : i1 to i32
    %c0_i32_9 = arith.constant 0 : i32
    %11 = arith.cmpi ne, %10, %c0_i32_9 : i32
    scf.if %11 {
      %c0_10 = arith.constant 0 : index
      %c0_11 = arith.constant 0 : index
      %12 = vector.load %arg6[%c0_10, %c0_11] : memref<16x128xf32, #tpu.memory_space<vmem>>, vector<16x128xf32>
      %cst_12 = arith.constant 2.000000e+00 : f32
      %13 = vector.broadcast %cst_12 : f32 to vector<16x128xf32>
      %14 = arith.mulf %12, %13 : vector<16x128xf32>
      %c0_13 = arith.constant 0 : index
      %c0_14 = arith.constant 0 : index
      %15 = vector.load %arg5[%c0_13, %c0_14] : memref<1x128xf32, #tpu.memory_space<vmem>>, vector<1x128xf32>
      %16 = vector.broadcast %15 : vector<1x128xf32> to vector<16x128xf32>
      %17 = arith.addf %14, %16 : vector<16x128xf32>
      %c0_15 = arith.constant 0 : index
      %c0_16 = arith.constant 0 : index
      %18 = vector.load %arg6[%c0_15, %c0_16] : memref<16x128xf32, #tpu.memory_space<vmem>>, vector<16x128xf32>
      tpu.vector_store %arg6[%c0_15, %c0_16], %17 {strides = array<i32>} : memref<16x128xf32, #tpu.memory_space<vmem>>, vector<16x128xf32>,
    } else {
    }
    return
  }
  func.func @transform_0(%arg0: i32, %arg1: i32, %arg2: i32) -> (i32, i32) {
    %c0_i32 = arith.constant 0 : i32
    return %arg0, %arg2 : i32, i32
  }
  func.func @transform_1(%arg0: i32, %arg1: i32, %arg2: i32) -> (i32, i32) {
    %c0_i32 = arith.constant 0 : i32
    return %arg2, %arg1 : i32, i32
  }
  func.func @transform_2(%arg0: i32, %arg1: i32, %arg2: i32) -> (i32, i32) {
    %c0_i32 = arith.constant 0 : i32
    %c0_i32_0 = arith.constant 0 : i32
    return %c0_i32, %arg1 : i32, i32
  }
  func.func @transform_3(%arg0: i32, %arg1: i32, %arg2: i32) -> (i32, i32) {
    %c0_i32 = arith.constant 0 : i32
    return %arg0, %arg1 : i32, i32
  }
}

</mosaic_0001>

<llo_original>
// kernel: tpu_custom_call.1
$region0: #{tpu_custom_call.1}
  #allocation0 [shape = 'u32[]', space=smem, size = 0x4, offset = 0x4, fixed_abs, tag = 'smem constant byte address 0x4 - core index']
  #allocation1 [shape = 'u32[144,128]{1,0:T(1,128)}', space=vmem, size = 0x12000, scoped, tag = 'internal scratch']
  %s0 = inlined_call_operand.hbm [shape: bf16[16,128], index: 0, kind: input, shape index: {}]
  %s1 = inlined_call_operand.hbm [shape: bf16[128,128], index: 1, kind: input, shape index: {}]
  %s2 = inlined_call_operand.vmem [shape: f32[1,128], index: 2, kind: input, shape index: {}]
  %s3 = inlined_call_operand.hbm [shape: f32[16,128], index: 3, kind: output, shape index: {}]
  %s4 = sld [smem:[#allocation0]]
  $region38: #{tpu_custom_call.1} parent=0
    _
  %s6 = ssub.s32 1, %s4
  %s7 = scalar_select 0, %s6, %s4
  $region1: #{tpu_custom_call.1} parent=0
    #allocation2 [shape = 'u8[4096]{0}', space=vmem, size = 0x1000, scoped, tag = 'input window, operand 0, single buffered']
    #allocation3 [shape = 's32[1]{0}', space=sflag, size = 0x4, scoped, tag = 'scoped memory for tpu_custom_call.1']
    #allocation4 [shape = 's32[1]{0}', space=sflag, size = 0x4, scoped, tag = 'scoped memory for tpu_custom_call.1']
    #allocation5 [shape = 'u8[32768]{0}', space=vmem, size = 0x8000, scoped, tag = 'input window, operand 1, single buffered']
    #allocation6 [shape = 's32[1]{0}', space=sflag, size = 0x4, scoped, tag = 'scoped memory for tpu_custom_call.1']
    #allocation7 [shape = 'u8[8192]{0}', space=vmem, size = 0x2000, scoped, tag = 'output window, operand 0, single buffered']
    %8 = vsyncpa [#allocation3], 0
    %9 = vsyncpa [#allocation6], 0
    %10 = vsyncpa [#allocation4], 0
    // Predicated region
    $region2: #{tpu_custom_call.1} parent=1 // pred_check
      _
    $region3: #{tpu_custom_call.1} parent=1 // pred_check_branch
      %12 = sbr.rel (0) target = $region5
    $region4: #{tpu_custom_call.1} parent=1 // pred_region
      %s14 = ssub.s32 128, 128
      %15 = vsyncadd [#allocation3], %s14
      %s16 = sshll.u32 [#allocation2], 4
      %s17 = int_to_ptr.vmem [resolvable:$true] %s16
      %22 = dma.hbm_to_vmem [thread:$0]  %s0, 128, %s17, [#allocation3], 64, 64, 4
    $region5: #{tpu_custom_call.1} parent=1 // pred_fallthru
      _
    // Predicated region
    $region6: #{tpu_custom_call.1} parent=1 // pred_check
      _
    $region7: #{tpu_custom_call.1} parent=1 // pred_check_branch
      %24 = sbr.rel (0) target = $region9
    $region8: #{tpu_custom_call.1} parent=1 // pred_region
      %s26 = ssub.s32 1024, 1024
      %27 = vsyncadd [#allocation6], %s26
      %s28 = sshll.u32 [#allocation5], 4
      %s29 = int_to_ptr.vmem [resolvable:$true] %s28
      %34 = dma.hbm_to_vmem [thread:$0]  %s1, 1024, %s29, [#allocation6], 64, 64, 4
    $region9: #{tpu_custom_call.1} parent=1 // pred_fallthru
      _
    // Predicated region
    $region10: #{tpu_custom_call.1} parent=1 // pred_check
      _
    $region11: #{tpu_custom_call.1} parent=1 // pred_check_branch
      %36 = sbr.rel (0) target = $region13
    $region12: #{tpu_custom_call.1} parent=1 // pred_region
      _
    $region13: #{tpu_custom_call.1} parent=1 // pred_fallthru
      _
    // Predicated region
    $region14: #{tpu_custom_call.1} parent=1 // pred_check
      _
    $region15: #{tpu_custom_call.1} parent=1 // pred_check_branch
      %38 = sbr.rel (0) target = $region17
    $region16: #{tpu_custom_call.1} parent=1 // pred_region
      %39 = dma.done [#allocation3], 128
    $region17: #{tpu_custom_call.1} parent=1 // pred_fallthru
      _
    // Predicated region
    $region18: #{tpu_custom_call.1} parent=1 // pred_check
      _
    $region19: #{tpu_custom_call.1} parent=1 // pred_check_branch
      %41 = sbr.rel (0) target = $region21
    $region20: #{tpu_custom_call.1} parent=1 // pred_region
      %42 = dma.done [#allocation6], 1024
    $region21: #{tpu_custom_call.1} parent=1 // pred_fallthru
      _
    %p44 = scmp.eq.s32.totalorder 0, 0
    // Predicated region
    $region22: #{tpu_custom_call.1} parent=1 // pred_check
      %p45 = pneg %p44
    $region23: #{tpu_custom_call.1} parent=1 // pred_check_branch
      %47 = sbr.rel (%p45) target = $region25
    $region24: #{tpu_custom_call.1} parent=1 // pred_region
      %48 = vst [vmem:[#allocation7] sm:$0xff] 0.0
      %49 = vst [vmem:[#allocation7 + $0x8] sm:$0xff] 0.0
    $region25: #{tpu_custom_call.1} parent=1 // pred_fallthru
      _
    %v50 = vld [vmem:[#allocation7] sm:$0xff]
    %v51 = vld [vmem:[#allocation7 + $0x8] sm:$0xff]
    %v52 = vld [vmem:[#allocation2] sm:$0xf]
    %v53 = vld [vmem:[#allocation2 + $0x4] sm:$0xf]
    %v54 = vld [vmem:[#allocation5] sm:$0xf]
    %v55 = vld [vmem:[#allocation5 + $0x4] sm:$0xf]
    %v56 = vld [vmem:[#allocation5 + $0x8] sm:$0xf]
    %v57 = vld [vmem:[#allocation5 + $0xc] sm:$0xf]
    %v58 = vld [vmem:[#allocation5 + $0x10] sm:$0xf]
    %v59 = vld [vmem:[#allocation5 + $0x14] sm:$0xf]
    %v60 = vld [vmem:[#allocation5 + $0x18] sm:$0xf]
    %v61 = vld [vmem:[#allocation5 + $0x1c] sm:$0xf]
    %v62 = vld [vmem:[#allocation5 + $0x20] sm:$0xf]
    %v63 = vld [vmem:[#allocation5 + $0x24] sm:$0xf]
    %v64 = vld [vmem:[#allocation5 + $0x28] sm:$0xf]
    %v65 = vld [vmem:[#allocation5 + $0x2c] sm:$0xf]
    %v66 = vld [vmem:[#allocation5 + $0x30] sm:$0xf]
    %v67 = vld [vmem:[#allocation5 + $0x34] sm:$0xf]
    %v68 = vld [vmem:[#allocation5 + $0x38] sm:$0xf]
    %v69 = vld [vmem:[#allocation5 + $0x3c] sm:$0xf]
    %v72 = vunpack.c.l.b16 %v52
    %v73 = vunpack.c.l.b16 %v53
    %v74 = vpack.c.b16 %v73, %v72
    %v92 = vunpack.c.l.b16 %v54
    %v93 = vunpack.c.l.b16 %v55
    %v94 = vunpack.c.l.b16 %v56
    %v95 = vunpack.c.l.b16 %v57
    %v96 = vunpack.c.l.b16 %v58
    %v97 = vunpack.c.l.b16 %v59
    %v98 = vunpack.c.l.b16 %v60
    %v99 = vunpack.c.l.b16 %v61
    %v100 = vunpack.c.l.b16 %v62
    %v101 = vunpack.c.l.b16 %v63
    %v102 = vunpack.c.l.b16 %v64
    %v103 = vunpack.c.l.b16 %v65
    %v104 = vunpack.c.l.b16 %v66
    %v105 = vunpack.c.l.b16 %v67
    %v106 = vunpack.c.l.b16 %v68
    %v107 = vunpack.c.l.b16 %v69
    %v108 = vpack.c.b16 %v93, %v92
    %v109 = vpack.c.b16 %v95, %v94
    %v110 = vpack.c.b16 %v97, %v96
    %v111 = vpack.c.b16 %v99, %v98
    %v112 = vpack.c.b16 %v101, %v100
    %v113 = vpack.c.b16 %v103, %v102
    %v114 = vpack.c.b16 %v105, %v104
    %v115 = vpack.c.b16 %v107, %v106
    %124 = vmatprep.subr.bf16.mxu0 0
    %125 = vmatpush1.bf16.msra.mxu0 %v108
    %126 = vmatprep.subr.bf16.mxu0 0
    %127 = vmatpush1.bf16.msra.mxu0 %v109
    %128 = vmatprep.subr.bf16.mxu0 0
    %129 = vmatpush1.bf16.msra.mxu0 %v110
    %130 = vmatprep.subr.bf16.mxu0 0
    %131 = vmatpush1.bf16.msra.mxu0 %v111
    %132 = vmatprep.subr.bf16.mxu0 0
    %133 = vmatpush1.bf16.msra.mxu0 %v112
    %134 = vmatprep.subr.bf16.mxu0 0
    %135 = vmatpush1.bf16.msra.mxu0 %v113
    %136 = vmatprep.subr.bf16.mxu0 0
    %137 = vmatpush1.bf16.msra.mxu0 %v114
    %138 = vmatprep.subr.bf16.mxu0 0
    %139 = vmatpush1.bf16.msra.mxu0 %v115
    %140 = vmatprep.subr.bf16.mxu0 0
    %141 = vmatpush1.bf16.msra.mxu0 0
    %142 = vmatprep.subr.bf16.mxu0 0
    %143 = vmatpush1.bf16.msra.mxu0 0
    %144 = vmatprep.subr.bf16.mxu0 0
    %145 = vmatpush1.bf16.msra.mxu0 0
    %146 = vmatprep.subr.bf16.mxu0 0
    %147 = vmatpush1.bf16.msra.mxu0 0
    %148 = vmatprep.subr.bf16.mxu0 0
    %149 = vmatpush1.bf16.msra.mxu0 0
    %150 = vmatprep.subr.bf16.mxu0 0
    %151 = vmatpush1.bf16.msra.mxu0 0
    %152 = vmatprep.subr.bf16.mxu0 0
    %153 = vmatpush1.bf16.msra.mxu0 0
    %154 = vmatprep.subr.bf16.mxu0 0
    %155 = vmatpush1.bf16.msra.mxu0 0
    %156 = vmatprep.mubr.bf16.mxu0 0
    %157 = vmatmul.mubr.bf16.gmra.mrb[0].mxu0 %v74
    %v158 = vpop.f32.mrb[0].mxu0
    %v159 = vadd.f32 0.0, %v158
    %v160 = vpop.f32.mrb[0].mxu0
    %v161 = vpop.f32.mrb[0].mxu0
    %v162 = vadd.f32 0.0, %v161
    %v163 = vpop.f32.mrb[0].mxu0
    %164 = vdwg.mxu0
    %v165 = vadd.f32 %v50, %v159
    %v166 = vadd.f32 %v51, %v162
    %167 = vst [vmem:[#allocation7] sm:$0xff] %v165
    %168 = vst [vmem:[#allocation7 + $0x8] sm:$0xff] %v166
    // Predicated region
    $region26: #{tpu_custom_call.1} parent=1 // pred_check
      %p169 = pneg %p44
    $region27: #{tpu_custom_call.1} parent=1 // pred_check_branch
      %171 = sbr.rel (%p169) target = $region29
    $region28: #{tpu_custom_call.1} parent=1 // pred_region
      %v172 = vld [vmem:[#allocation7] sm:$0xff]
      %v173 = vld [vmem:[#allocation7 + $0x8] sm:$0xff]
      %v174 = vmul.f32 %v172, 2.0
      %v175 = vmul.f32 %v173, 2.0
      %v176 = vld [vmem:[%s2] sm:$0x1]
      %v178 = vlaneseq
      %v179 = vshrl.u32 %v178, 7
      %v180 = vsub.s32 0, %v179
      %v181 = vrot.slane %v176, %v180
      %v183 = vadd.f32 %v174, %v181
      %v184 = vadd.f32 %v175, %v181
      %185 = vst [vmem:[#allocation7] sm:$0xff] %v183
      %186 = vst [vmem:[#allocation7 + $0x8] sm:$0xff] %v184
    $region29: #{tpu_custom_call.1} parent=1 // pred_fallthru
      _
    // Predicated region
    $region30: #{tpu_custom_call.1} parent=1 // pred_check
      _
    $region31: #{tpu_custom_call.1} parent=1 // pred_check_branch
      %188 = sbr.rel (0) target = $region33
    $region32: #{tpu_custom_call.1} parent=1 // pred_region
      %s190 = ssub.s32 256, 256
      %191 = vsyncadd [#allocation4], %s190
      %s192 = sshll.u32 [#allocation7], 4
      %s193 = int_to_ptr.vmem [resolvable:$true] %s192
      %198 = dma.vmem_to_hbm [thread:$0]  %s193, 256, %s3, [#allocation4], 128, 128, 8
    $region33: #{tpu_custom_call.1} parent=1 // pred_fallthru
      _
    // Predicated region
    $region34: #{tpu_custom_call.1} parent=1 // pred_check
      _
    $region35: #{tpu_custom_call.1} parent=1 // pred_check_branch
      %200 = sbr.rel (0) target = $region37
    $region36: #{tpu_custom_call.1} parent=1 // pred_region
      %201 = dma.done [#allocation4], 256
    $region37: #{tpu_custom_call.1} parent=1 // pred_fallthru
      _
    %202 = vsyncpa [#allocation3], 1
    %203 = vsyncpa [#allocation6], 1
    %204 = vsyncpa [#allocation4], 1

</llo_original>
